<compile_context>
chip_gen: v6e
topology: v6e:2x2x1
jax: 0.10.0
libtpu: 0.0.40
codegen_flags: <defaults>
</compile_context>

<pallas_src>
import functools
import math

import jax
import jax.numpy as jnp
from jax.scipy import special as jsp_special
from jax.experimental import pallas as pl
from jax.experimental.pallas import tpu as pltpu


def _round_up(v, m):
    return -(-v // m) * m


# ---------------------------------------------------------------------------
# In-kernel erf: clamped single-range A&S 7.1.26, pre-scaled to return 0.5*erf.
# ---------------------------------------------------------------------------
_AS_P = 0.3275911
_AS_H1 = 0.5 * 0.254829592
_AS_H2 = 0.5 * -0.284496736
_AS_H3 = 0.5 * 1.421413741
_AS_H4 = 0.5 * -1.453152027
_AS_H5 = 0.5 * 1.061405429
_ERF_CLAMP = 4.0  # |erf(4) - 1| ~ 1.5e-8, far below the 1e-6 likelihood floor.


def _half_erf(z):
    """0.5 * erf(z) via clamped A&S 7.1.26 (abs err < ~2e-7 on the half scale).

    One rational substitution + one exp per call: ~half the VALU ops of XLA's
    two-branch erf lowering.  Coefficients are pre-halved so the later 0.5*
    multiplies in the CDF algebra disappear.
    """
    az = jnp.minimum(jnp.abs(z), _ERF_CLAMP)
    t = pl.reciprocal(1.0 + _AS_P * az, approx=False)       # EUP + Newton refine
    poly = t * (_AS_H1 + t * (_AS_H2 + t * (_AS_H3 + t * (_AS_H4 + t * _AS_H5))))
    h = 0.5 - poly * jnp.exp(-(az * az))                     # exp on the EUP slot
    return jnp.where(z < 0.0, -h, h)


def _gaussian_conditional_kernel(x_ref, scale_ref, mean_ref, out_ref, *,
                                 scale_bound, likelihood_bound,
                                 x_lower_bound, x_upper_bound):
    x = x_ref[...]
    # lowerbound(scale, scale_bound): the forward pass is an elementwise max.
    scale = jnp.maximum(scale_ref[...], scale_bound)
    value = x - mean_ref[...]

    # Exact reciprocal (approx=True would blow the 1e-5 rtol budget).
    inv_scale = pl.reciprocal(scale, approx=False)
    s = inv_scale * 0.7071067811865476       # fold 1/sqrt(2) into one scale

    # Phi(t) = 0.5 * (1 + erf(t / sqrt(2)))
    #   upper      = Phi((0.5 - value)/scale)       = 0.5 + 0.5*erf(a)
    #   lower_plus = 1 - Phi((-0.5 - value)/scale)  = 0.5 + 0.5*erf(b)
    #   likelihood = upper - lower                  = 0.5*erf(a) + 0.5*erf(b)
    # NOTE: like the reference, the likelihood cancels catastrophically in the
    # deep tails; the likelihood_bound floor (1e-6) hides it for the defaults.
    ha = _half_erf((0.5 - value) * s)
    hb = _half_erf((0.5 + value) * s)

    likelihood = ha + hb
    upper = ha + 0.5                 # == upper_plus in the reference module
    lower_plus = hb + 0.5

    # Out-of-range clamps (compare + select instead of float-mask blends).
    likelihood = jnp.where(x > x_upper_bound, lower_plus, likelihood)
    likelihood = jnp.where(x < x_lower_bound, upper, likelihood)

    # lowerbound(likelihood, likelihood_bound): elementwise max in the forward.
    if likelihood_bound > 0:
        likelihood = jnp.maximum(likelihood, likelihood_bound)

    out_ref[...] = likelihood.astype(out_ref.dtype)


# ---------------------------------------------------------------------------
# Wrapper
# ---------------------------------------------------------------------------
def _vmem_budget():
    """Generation-aware scoped-VMEM limit (bytes) with a conservative fallback."""
    try:
        cap = pltpu.get_tpu_info().vmem_capacity_bytes
    except Exception:
        cap = 64 << 20                       # assume the smallest (v7x: 64 MiB/TC)
    # 64 MiB on v5e/v6e (128 MiB physical), 48 MiB on v7x (64 MiB physical).
    return min((cap * 3) // 4, 64 << 20)


def _forward_padded(kernel, xf, sf, mf, n, dtype, compiler_params, cost):
    """Safety-net path: pad the tail tile to a (rows, 128) stream (full copy)."""
    lanes = 128
    n_pad = _round_up(n, 8 * lanes)

    def prep(a, pad_value):
        a = jnp.pad(a, (0, n_pad - n), constant_values=pad_value)
        return a.reshape(n_pad // lanes, lanes)

    rows = n_pad // lanes
    blk = min(2048, rows)
    spec = pl.BlockSpec((blk, lanes), lambda i: (i, 0))
    out = pl.pallas_call(
        kernel,
        out_shape=jax.ShapeDtypeStruct((rows, lanes), dtype),
        grid=(pl.cdiv(rows, blk),),
        in_specs=[spec, spec, spec],
        out_specs=spec,
        compiler_params=compiler_params,
        cost_estimate=cost,
    )(prep(xf, 0.0), prep(sf, 1.0), prep(mf, 0.0))
    return out.reshape(-1)[:n]


def gaussian_conditional(x, scale, mean, *,
                         scale_bound=1e-5, likelihood_bound=1e-6,
                         x_min=-255.0, x_max=255.0,
                         block_rows=8192, in_buffer_count=2):
    """Elementwise GaussianConditional forward. x/scale/mean: same-shape f32."""
    assert x.shape == scale.shape == mean.shape
    orig_shape = x.shape
    dtype = x.dtype
    n = math.prod(orig_shape)
    lanes = 128
    itemsize = jnp.dtype(dtype).itemsize

    kernel = functools.partial(
        _gaussian_conditional_kernel,
        scale_bound=float(scale_bound),
        likelihood_bound=float(likelihood_bound),
        x_lower_bound=float(x_min) + 0.001,
        x_upper_bound=float(x_max) - 0.001,
    )

    # ~55-60 VALU ops/element (dominated by the two erf chains); 2 exp + 3 recip.
    cost = pl.CostEstimate(flops=60 * n, transcendentals=5 * n,
                           bytes_accessed=4 * n * itemsize)

    vmem_limit = _vmem_budget()
    compiler_params = pltpu.CompilerParams(
        dimension_semantics=("parallel",),       # shard blocks across v7x's 2 TCs
        vmem_limit_bytes=vmem_limit)

    if n % lanes == 0:
        # Fast path: free reshape to a lane-dense (rows, 128) stream; no padding
        # even when rows % 8 != 0 (Pallas masks the partial last block).
        rows = n // lanes
        # Largest block such that 3 inputs x in_buffer_count buffers plus the
        # double-buffered output stay under ~75% of the scoped-VMEM limit.
        copies = 3 * in_buffer_count + 2
        max_blk = max(8, ((vmem_limit * 3 // 4) // (copies * lanes * itemsize)) // 8 * 8)
        blk = min(block_rows, max_blk)
        if rows > 8:
            # Guarantee >=2 grid blocks so the 'parallel' grid dim actually uses
            # both TensorCores on v7x (and avoids one oversize block on small inputs).
            blk = min(blk, _round_up(-(-rows // 2), 8))
        blk = max(8, min(blk, _round_up(rows, 8)))

        spec_kwargs = {}
        if in_buffer_count > 2:     # optional deeper input pipeline (sweepable on v6e)
            spec_kwargs["pipeline_mode"] = pl.Buffered(in_buffer_count)
        in_spec = pl.BlockSpec((blk, lanes), lambda i: (i, 0), **spec_kwargs)
        out_spec = pl.BlockSpec((blk, lanes), lambda i: (i, 0))

        out = pl.pallas_call(
            kernel,
            out_shape=jax.ShapeDtypeStruct((rows, lanes), dtype),
            grid=(pl.cdiv(rows, blk),),          # partial last block is masked
            in_specs=[in_spec, in_spec, in_spec],
            out_specs=out_spec,
            compiler_params=compiler_params,
            cost_estimate=cost,
        )(x.reshape(rows, lanes), scale.reshape(rows, lanes), mean.reshape(rows, lanes))
        return out.reshape(orig_shape)

    # Ragged path (n % 128 != 0): block the flat 1-D view directly and let
    # Pallas mask the partial tail block -- no jnp.pad / slice copies.  Ragged
    # shapes are an edge case, so a modest block keeps the VMEM footprint small.
    xf, sf, mf = x.reshape(-1), scale.reshape(-1), mean.reshape(-1)
    try:
        blk_elems = 32 * 1024
        if n > 1024:
            blk_elems = min(blk_elems, _round_up(-(-n // 2), 1024))  # >= 2 blocks
        blk_elems = min(blk_elems, _round_up(n, 1024))
        spec1d = pl.BlockSpec((blk_elems,), lambda i: (i,))
        out = pl.pallas_call(
            kernel,
            out_shape=jax.ShapeDtypeStruct((n,), dtype),
            grid=(pl.cdiv(n, blk_elems),),
            in_specs=[spec1d, spec1d, spec1d],
            out_specs=spec1d,
            compiler_params=compiler_params,
            cost_estimate=cost,
        )(xf, sf, mf)
    except Exception:
        # Safety net (costs a full-array pad/slice copy; only on n % 128 != 0).
        out = _forward_padded(kernel, xf, sf, mf, n, dtype, compiler_params, cost)
    return out.reshape(orig_shape)


# ---------------------------------------------------------------------------
# Pure-JAX reference (forward only) and self-test
# ---------------------------------------------------------------------------
def _reference(x, scale, mean, *, scale_bound=1e-5, likelihood_bound=1e-6,
               x_min=-255.0, x_max=255.0):
    scale = jnp.maximum(scale, scale_bound)
    value = x - mean
    const = -(2.0 ** -0.5)
    std_c = lambda v: 0.5 * jsp_special.erfc(const * v)
    upper = std_c((0.5 - value) / scale)
    lower = std_c((-0.5 - value) / scale)
    likelihood = upper - lower
    cond_b = (x > (x_max - 0.001)).astype(x.dtype)
    likelihood = cond_b * (1.0 - lower) + (1.0 - cond_b) * likelihood
    cond_c = (x < (x_min + 0.001)).astype(x.dtype)
    likelihood = cond_c * upper + (1.0 - cond_c) * likelihood
    if likelihood_bound > 0:
        likelihood = jnp.maximum(likelihood, likelihood_bound)
    return likelihood


if __name__ == "__main__":
    key = jax.random.PRNGKey(0)

    def make_inputs(shape, k):
        k1, k2, k3 = jax.random.split(k, 3)
        x = jax.random.uniform(k1, shape, jnp.float32, -260.0, 260.0)
        mean = jax.random.normal(k2, shape, jnp.float32) * 2.0
        scale = jnp.abs(jax.random.normal(k3, shape, jnp.float32)) * 0.5
        return x, scale, mean

    k_a, k_b, k_c = jax.random.split(key, 3)

    # Main case: NCHW latents, multiple of 1024 elements -> 2-D fast path, >=2 blocks.
    x, scale, mean = make_inputs((2, 4, 16, 16), k_a)
    out = jax.block_until_ready(gaussian_conditional(x, scale, mean))
    ref = _reference(x, scale, mean)
    assert out.shape == (2, 4, 16, 16)
    assert jnp.allclose(out, ref, rtol=1e-5, atol=1e-6), "mismatch (main case)"

    # Multiple of 128 but not of 1024 (rows=19): 2-D path, partial last block,
    # no padding copies.
    x, scale, mean = make_inputs((1, 19, 8, 16), k_b)
    out = jax.block_until_ready(gaussian_conditional(x, scale, mean))
    ref = _reference(x, scale, mean)
    assert jnp.allclose(out, ref, rtol=1e-5, atol=1e-6), "mismatch (partial rows)"

    # Ragged case (n % 128 != 0): flat 1-D path with a masked tail block.
    x, scale, mean = make_inputs((3, 5, 7, 11), k_c)
    out = jax.block_until_ready(gaussian_conditional(x, scale, mean))
    ref = _reference(x, scale, mean)
    assert jnp.allclose(out, ref, rtol=1e-5, atol=1e-6), "mismatch (ragged)"

    print("KERNEL_OK")
</pallas_src>

<mosaic_0001>
module attributes {stable_mosaic.version = 11 : i64} {
  func.func @_gaussian_conditional_kernel(%arg0: i32, %arg1: memref<8x128xf32, #tpu.memory_space<vmem>>, %arg2: memref<8x128xf32, #tpu.memory_space<vmem>>, %arg3: memref<8x128xf32, #tpu.memory_space<vmem>>, %arg4: memref<8x128xf32, #tpu.memory_space<vmem>>) attributes {dimension_semantics = [#tpu.dimension_semantics<parallel>], iteration_bounds = array<i64: 2>, scalar_prefetch = 0 : i64, scratch_operands = 0 : i64, tpu.core_type = #tpu.core_type<tc>, window_params = [{transform_indices = @transform_0, window_bounds = array<i64: 8, 128>}, {transform_indices = @transform_1, window_bounds = array<i64: 8, 128>}, {transform_indices = @transform_2, window_bounds = array<i64: 8, 128>}, {transform_indices = @transform_3, window_bounds = array<i64: 8, 128>}]} {
    %c0 = arith.constant 0 : index
    %c0_0 = arith.constant 0 : index
    %0 = vector.load %arg1[%c0, %c0_0] : memref<8x128xf32, #tpu.memory_space<vmem>>, vector<8x128xf32>
    %c0_1 = arith.constant 0 : index
    %c0_2 = arith.constant 0 : index
    %1 = vector.load %arg2[%c0_1, %c0_2] : memref<8x128xf32, #tpu.memory_space<vmem>>, vector<8x128xf32>
    %cst = arith.constant 9.99999974E-6 : f32
    %2 = vector.broadcast %cst : f32 to vector<8x128xf32>
    %3 = arith.maximumf %1, %2 : vector<8x128xf32>
    %c0_3 = arith.constant 0 : index
    %c0_4 = arith.constant 0 : index
    %4 = vector.load %arg3[%c0_3, %c0_4] : memref<8x128xf32, #tpu.memory_space<vmem>>, vector<8x128xf32>
    %5 = arith.subf %0, %4 : vector<8x128xf32>
    %6 = tpu.reciprocal %3 : vector<8x128xf32> -> vector<8x128xf32>
    %cst_5 = arith.constant 0.707106769 : f32
    %7 = vector.broadcast %cst_5 : f32 to vector<8x128xf32>
    %8 = arith.mulf %6, %7 : vector<8x128xf32>
    %cst_6 = arith.constant 5.000000e-01 : f32
    %9 = vector.broadcast %cst_6 : f32 to vector<8x128xf32>
    %10 = arith.subf %9, %5 : vector<8x128xf32>
    %11 = arith.mulf %10, %8 : vector<8x128xf32>
    %12 = math.absf %11 : vector<8x128xf32>
    %cst_7 = arith.constant 4.000000e+00 : f32
    %13 = vector.broadcast %cst_7 : f32 to vector<8x128xf32>
    %14 = arith.minimumf %12, %13 : vector<8x128xf32>
    %cst_8 = arith.constant 0.327591091 : f32
    %15 = vector.broadcast %cst_8 : f32 to vector<8x128xf32>
    %16 = arith.mulf %15, %14 : vector<8x128xf32>
    %cst_9 = arith.constant 1.000000e+00 : f32
    %17 = vector.broadcast %cst_9 : f32 to vector<8x128xf32>
    %18 = arith.addf %17, %16 : vector<8x128xf32>
    %19 = tpu.reciprocal %18 : vector<8x128xf32> -> vector<8x128xf32>
    %cst_10 = arith.constant 0.53070271 : f32
    %20 = vector.broadcast %cst_10 : f32 to vector<8x128xf32>
    %21 = arith.mulf %19, %20 : vector<8x128xf32>
    %cst_11 = arith.constant -0.72657603 : f32
    %22 = vector.broadcast %cst_11 : f32 to vector<8x128xf32>
    %23 = arith.addf %22, %21 : vector<8x128xf32>
    %24 = arith.mulf %19, %23 : vector<8x128xf32>
    %cst_12 = arith.constant 0.710706889 : f32
    %25 = vector.broadcast %cst_12 : f32 to vector<8x128xf32>
    %26 = arith.addf %25, %24 : vector<8x128xf32>
    %27 = arith.mulf %19, %26 : vector<8x128xf32>
    %cst_13 = arith.constant -0.142248362 : f32
    %28 = vector.broadcast %cst_13 : f32 to vector<8x128xf32>
    %29 = arith.addf %28, %27 : vector<8x128xf32>
    %30 = arith.mulf %19, %29 : vector<8x128xf32>
    %cst_14 = arith.constant 0.127414793 : f32
    %31 = vector.broadcast %cst_14 : f32 to vector<8x128xf32>
    %32 = arith.addf %31, %30 : vector<8x128xf32>
    %33 = arith.mulf %19, %32 : vector<8x128xf32>
    %34 = arith.mulf %14, %14 : vector<8x128xf32>
    %cst_15 = arith.constant 0.000000e+00 : f32
    %35 = vector.broadcast %cst_15 : f32 to vector<8x128xf32>
    %36 = arith.subf %35, %34 : vector<8x128xf32>
    %37 = math.exp %36 : vector<8x128xf32>
    %38 = arith.mulf %33, %37 : vector<8x128xf32>
    %cst_16 = arith.constant 5.000000e-01 : f32
    %39 = vector.broadcast %cst_16 : f32 to vector<8x128xf32>
    %40 = arith.subf %39, %38 : vector<8x128xf32>
    %cst_17 = arith.constant 0.000000e+00 : f32
    %41 = vector.broadcast %cst_17 : f32 to vector<8x128xf32>
    %42 = arith.cmpf olt, %11, %41 : vector<8x128xf32>
    %cst_18 = arith.constant 0.000000e+00 : f32
    %43 = vector.broadcast %cst_18 : f32 to vector<8x128xf32>
    %44 = arith.subf %43, %40 : vector<8x128xf32>
    %45 = arith.select %42, %44, %40 : vector<8x128xi1>, vector<8x128xf32>
    %cst_19 = arith.constant 5.000000e-01 : f32
    %46 = vector.broadcast %cst_19 : f32 to vector<8x128xf32>
    %47 = arith.addf %46, %5 : vector<8x128xf32>
    %48 = arith.mulf %47, %8 : vector<8x128xf32>
    %49 = math.absf %48 : vector<8x128xf32>
    %cst_20 = arith.constant 4.000000e+00 : f32
    %50 = vector.broadcast %cst_20 : f32 to vector<8x128xf32>
    %51 = arith.minimumf %49, %50 : vector<8x128xf32>
    %cst_21 = arith.constant 0.327591091 : f32
    %52 = vector.broadcast %cst_21 : f32 to vector<8x128xf32>
    %53 = arith.mulf %52, %51 : vector<8x128xf32>
    %cst_22 = arith.constant 1.000000e+00 : f32
    %54 = vector.broadcast %cst_22 : f32 to vector<8x128xf32>
    %55 = arith.addf %54, %53 : vector<8x128xf32>
    %56 = tpu.reciprocal %55 : vector<8x128xf32> -> vector<8x128xf32>
    %cst_23 = arith.constant 0.53070271 : f32
    %57 = vector.broadcast %cst_23 : f32 to vector<8x128xf32>
    %58 = arith.mulf %56, %57 : vector<8x128xf32>
    %cst_24 = arith.constant -0.72657603 : f32
    %59 = vector.broadcast %cst_24 : f32 to vector<8x128xf32>
    %60 = arith.addf %59, %58 : vector<8x128xf32>
    %61 = arith.mulf %56, %60 : vector<8x128xf32>
    %cst_25 = arith.constant 0.710706889 : f32
    %62 = vector.broadcast %cst_25 : f32 to vector<8x128xf32>
    %63 = arith.addf %62, %61 : vector<8x128xf32>
    %64 = arith.mulf %56, %63 : vector<8x128xf32>
    %cst_26 = arith.constant -0.142248362 : f32
    %65 = vector.broadcast %cst_26 : f32 to vector<8x128xf32>
    %66 = arith.addf %65, %64 : vector<8x128xf32>
    %67 = arith.mulf %56, %66 : vector<8x128xf32>
    %cst_27 = arith.constant 0.127414793 : f32
    %68 = vector.broadcast %cst_27 : f32 to vector<8x128xf32>
    %69 = arith.addf %68, %67 : vector<8x128xf32>
    %70 = arith.mulf %56, %69 : vector<8x128xf32>
    %71 = arith.mulf %51, %51 : vector<8x128xf32>
    %cst_28 = arith.constant 0.000000e+00 : f32
    %72 = vector.broadcast %cst_28 : f32 to vector<8x128xf32>
    %73 = arith.subf %72, %71 : vector<8x128xf32>
    %74 = math.exp %73 : vector<8x128xf32>
    %75 = arith.mulf %70, %74 : vector<8x128xf32>
    %cst_29 = arith.constant 5.000000e-01 : f32
    %76 = vector.broadcast %cst_29 : f32 to vector<8x128xf32>
    %77 = arith.subf %76, %75 : vector<8x128xf32>
    %cst_30 = arith.constant 0.000000e+00 : f32
    %78 = vector.broadcast %cst_30 : f32 to vector<8x128xf32>
    %79 = arith.cmpf olt, %48, %78 : vector<8x128xf32>
    %cst_31 = arith.constant 0.000000e+00 : f32
    %80 = vector.broadcast %cst_31 : f32 to vector<8x128xf32>
    %81 = arith.subf %80, %77 : vector<8x128xf32>
    %82 = arith.select %79, %81, %77 : vector<8x128xi1>, vector<8x128xf32>
    %83 = arith.addf %45, %82 : vector<8x128xf32>
    %cst_32 = arith.constant 5.000000e-01 : f32
    %84 = vector.broadcast %cst_32 : f32 to vector<8x128xf32>
    %85 = arith.addf %45, %84 : vector<8x128xf32>
    %cst_33 = arith.constant 5.000000e-01 : f32
    %86 = vector.broadcast %cst_33 : f32 to vector<8x128xf32>
    %87 = arith.addf %82, %86 : vector<8x128xf32>
    %cst_34 = arith.constant 2.549990e+02 : f32
    %88 = vector.broadcast %cst_34 : f32 to vector<8x128xf32>
    %89 = arith.cmpf ogt, %0, %88 : vector<8x128xf32>
    %90 = arith.select %89, %87, %83 : vector<8x128xi1>, vector<8x128xf32>
    %cst_35 = arith.constant -2.549990e+02 : f32
    %91 = vector.broadcast %cst_35 : f32 to vector<8x128xf32>
    %92 = arith.cmpf olt, %0, %91 : vector<8x128xf32>
    %93 = arith.select %92, %85, %90 : vector<8x128xi1>, vector<8x128xf32>
    %cst_36 = arith.constant 9.99999997E-7 : f32
    %94 = vector.broadcast %cst_36 : f32 to vector<8x128xf32>
    %95 = arith.maximumf %93, %94 : vector<8x128xf32>
    %c0_37 = arith.constant 0 : index
    %c0_38 = arith.constant 0 : index
    %96 = vector.load %arg4[%c0_37, %c0_38] : memref<8x128xf32, #tpu.memory_space<vmem>>, vector<8x128xf32>
    tpu.vector_store %arg4[%c0_37, %c0_38], %95 {strides = array<i32>} : memref<8x128xf32, #tpu.memory_space<vmem>>, vector<8x128xf32>,
    return
  }
  func.func @transform_0(%arg0: i32) -> (i32, i32) {
    %c0_i32 = arith.constant 0 : i32
    %c0_i32_0 = arith.constant 0 : i32
    return %arg0, %c0_i32 : i32, i32
  }
  func.func @transform_1(%arg0: i32) -> (i32, i32) {
    %c0_i32 = arith.constant 0 : i32
    %c0_i32_0 = arith.constant 0 : i32
    return %arg0, %c0_i32 : i32, i32
  }
  func.func @transform_2(%arg0: i32) -> (i32, i32) {
    %c0_i32 = arith.constant 0 : i32
    %c0_i32_0 = arith.constant 0 : i32
    return %arg0, %c0_i32 : i32, i32
  }
  func.func @transform_3(%arg0: i32) -> (i32, i32) {
    %c0_i32 = arith.constant 0 : i32
    %c0_i32_0 = arith.constant 0 : i32
    return %arg0, %c0_i32 : i32, i32
  }
}

</mosaic_0001>

<llo_original>
// kernel: tpu_custom_call.1
$region0: #{tpu_custom_call.1}
  #allocation0 [shape = 'u32[]', space=smem, size = 0x4, offset = 0x4, fixed_abs, tag = 'smem constant byte address 0x4 - core index']
  #allocation1 [shape = 'u32[144,128]{1,0:T(1,128)}', space=vmem, size = 0x12000, scoped, tag = 'internal scratch']
  %s0 = inlined_call_operand.hbm [shape: f32[16,128], index: 0, kind: input, shape index: {}]
  %s1 = inlined_call_operand.hbm [shape: f32[16,128], index: 1, kind: input, shape index: {}]
  %s2 = inlined_call_operand.hbm [shape: f32[16,128], index: 2, kind: input, shape index: {}]
  %s3 = inlined_call_operand.hbm [shape: f32[16,128], index: 3, kind: output, shape index: {}]
  %s4 = sld [smem:[#allocation0]]
  $region57: #{tpu_custom_call.1} parent=0
    _
  %s6 = ssub.s32 1, %s4
  %s7 = scalar_select 0, %s6, %s4
  $region1: #{tpu_custom_call.1} parent=0
    #allocation2 [shape = 'u8[8192]{0}', space=vmem, size = 0x2000, scoped, tag = 'input window, operand 0']
    #allocation3 [shape = 's32[2]{0}', space=sflag, size = 0x8, scoped, tag = 'scoped memory for tpu_custom_call.1']
    #allocation4 [shape = 's32[2]{0}', space=sflag, size = 0x8, scoped, tag = 'scoped memory for tpu_custom_call.1']
    #allocation5 [shape = 'u8[8192]{0}', space=vmem, size = 0x2000, scoped, tag = 'input window, operand 1']
    #allocation6 [shape = 's32[2]{0}', space=sflag, size = 0x8, scoped, tag = 'scoped memory for tpu_custom_call.1']
    #allocation7 [shape = 'u8[8192]{0}', space=vmem, size = 0x2000, scoped, tag = 'input window, operand 2']
    #allocation8 [shape = 'u8[8192]{0}', space=vmem, size = 0x2000, scoped, tag = 'output window, operand 0']
    %8 = vsyncpa [#allocation3], 0
    %s9 = scalar_lea.sflag [#allocation3], 1
    %10 = vsyncpa %s9, 0
    %11 = vsyncpa [#allocation6], 0
    %s12 = scalar_lea.sflag [#allocation6], 1
    %13 = vsyncpa %s12, 0
    %14 = vsyncpa [#allocation4], 0
    %s15 = scalar_lea.sflag [#allocation4], 1
    %16 = vsyncpa %s15, 0
    loop: start=0, step=1, limit=4
    $region2: #{tpu_custom_call.1} parent=1 // loop_pre_header
      _
    $region3: #{tpu_custom_call.1} parent=1 // loop_header
      %s18 = sphi 0, %s22
      %p19 = scmp.ge.s32.totalorder %s18, 4
      %s28 = sphi 0, %s30
      %s31 = sphi 0, %s28
      %s32 = sphi 0, %s31
      %s48 = sphi 0, %s32
      %s54 = sphi 0, %s56
      %s57 = sphi 0, %s54
      %s58 = sphi 0, %s57
      %s74 = sphi 0, %s58
      %s80 = sphi 0, %s82
      %s83 = sphi 0, %s80
      %s84 = sphi 0, %s83
      %s100 = sphi 0, %s84
      %s106 = sphi 0, %s108
      %s109 = sphi 0, %s106
      %s110 = sphi 0, %s109
      %s126 = sphi 0, %s110
    $region4: #{tpu_custom_call.1} parent=1 // loop_header_branch
      %21 = sbr.rel (%p19) target = $region8
    $region5: #{tpu_custom_call.1} parent=1 // loop_body
      %s23 = ssub.s32 %s18, 1
      %s24 = ssub.s32 %s18, 2
      %s25 = sadd.s32 %s18, 1
      %s26 = ssub.s32 %s18, %s25
      %p27 = scmp.eq.s32.totalorder %s26, 0
      %s29 = sadd.s32 %s28, 1
      %s30 = scalar_select %p27, %s28, %s29
      %p33 = pneg %p27
      %p34 = scmp.eq.s32.totalorder %s18, 1
      %p35 = por %p33, %p34
      %p36 = scmp.ne.s32.totalorder %s28, %s31
      %p37 = scmp.eq.s32.totalorder %s18, 0
      %p38 = por %p36, %p37
      %p39 = scmp.ne.s32.totalorder %s28, %s31
      %p40 = scmp.eq.s32.totalorder %s23, 1
      %p41 = por %p39, %p40
      %p42 = scmp.ne.s32.totalorder %s31, %s32
      %p43 = scmp.eq.s32.totalorder %s23, 0
      %p44 = por %p42, %p43
      %p45 = scmp.ne.s32.totalorder %s31, %s32
      %p46 = scmp.eq.s32.totalorder %s24, 1
      %p47 = por %p45, %p46
      %p49 = scmp.ne.s32.totalorder %s32, %s48
      %p50 = scmp.eq.s32.totalorder %s24, 0
      %p51 = por %p49, %p50
      %s52 = ssub.s32 %s18, %s25
      %p53 = scmp.eq.s32.totalorder %s52, 0
      %s55 = sadd.s32 %s54, 1
      %s56 = scalar_select %p53, %s54, %s55
      %p59 = pneg %p53
      %p60 = scmp.eq.s32.totalorder %s18, 1
      %p61 = por %p59, %p60
      %p62 = scmp.ne.s32.totalorder %s54, %s57
      %p63 = scmp.eq.s32.totalorder %s18, 0
      %p64 = por %p62, %p63
      %p65 = scmp.ne.s32.totalorder %s54, %s57
      %p66 = scmp.eq.s32.totalorder %s23, 1
      %p67 = por %p65, %p66
      %p68 = scmp.ne.s32.totalorder %s57, %s58
      %p69 = scmp.eq.s32.totalorder %s23, 0
      %p70 = por %p68, %p69
      %p71 = scmp.ne.s32.totalorder %s57, %s58
      %p72 = scmp.eq.s32.totalorder %s24, 1
      %p73 = por %p71, %p72
      %p75 = scmp.ne.s32.totalorder %s58, %s74
      %p76 = scmp.eq.s32.totalorder %s24, 0
      %p77 = por %p75, %p76
      %s78 = ssub.s32 %s18, %s25
      %p79 = scmp.eq.s32.totalorder %s78, 0
      %s81 = sadd.s32 %s80, 1
      %s82 = scalar_select %p79, %s80, %s81
      %p85 = pneg %p79
      %p86 = scmp.eq.s32.totalorder %s18, 1
      %p87 = por %p85, %p86
      %p88 = scmp.ne.s32.totalorder %s80, %s83
      %p89 = scmp.eq.s32.totalorder %s18, 0
      %p90 = por %p88, %p89
      %p91 = scmp.ne.s32.totalorder %s80, %s83
      %p92 = scmp.eq.s32.totalorder %s23, 1
      %p93 = por %p91, %p92
      %p94 = scmp.ne.s32.totalorder %s83, %s84
      %p95 = scmp.eq.s32.totalorder %s23, 0
      %p96 = por %p94, %p95
      %p97 = scmp.ne.s32.totalorder %s83, %s84
      %p98 = scmp.eq.s32.totalorder %s24, 1
      %p99 = por %p97, %p98
      %p101 = scmp.ne.s32.totalorder %s84, %s100
      %p102 = scmp.eq.s32.totalorder %s24, 0
      %p103 = por %p101, %p102
      %s104 = ssub.s32 %s18, %s25
      %p105 = scmp.eq.s32.totalorder %s104, 0
      %s107 = sadd.s32 %s106, 1
      %s108 = scalar_select %p105, %s106, %s107
      %p111 = pneg %p105
      %p112 = scmp.eq.s32.totalorder %s18, 1
      %p113 = por %p111, %p112
      %p114 = scmp.ne.s32.totalorder %s106, %s109
      %p115 = scmp.eq.s32.totalorder %s18, 0
      %p116 = por %p114, %p115
      %p117 = scmp.ne.s32.totalorder %s106, %s109
      %p118 = scmp.eq.s32.totalorder %s23, 1
      %p119 = por %p117, %p118
      %p120 = scmp.ne.s32.totalorder %s109, %s110
      %p121 = scmp.eq.s32.totalorder %s23, 0
      %p122 = por %p120, %p121
      %p123 = scmp.ne.s32.totalorder %s109, %s110
      %p124 = scmp.eq.s32.totalorder %s24, 1
      %p125 = por %p123, %p124
      %p127 = scmp.ne.s32.totalorder %s110, %s126
      %p128 = scmp.eq.s32.totalorder %s24, 0
      %p129 = por %p127, %p128
      %p130 = scmp.le.s32.totalorder 1, %s18
      %p131 = scmp.lt.s32.totalorder %s18, 3
      %p132 = pnand %p130, %p131
      %p133 = pneg %p132
      // Predicated region
      $region9: #{tpu_custom_call.1} parent=5 // pred_check
        _
      $region10: #{tpu_custom_call.1} parent=5 // pred_check_branch
        %135 = sbr.rel (%p132) target = $region12
      $region11: #{tpu_custom_call.1} parent=5 // pred_region
        %s136 = ssub.s32 %s18, 1
      $region12: #{tpu_custom_call.1} parent=5 // pred_fallthru
        _
      %p137 = scmp.lt.s32.totalorder %s18, 2
      // Predicated region
      $region13: #{tpu_custom_call.1} parent=5 // pred_check
        %p138 = pneg %p137
      $region14: #{tpu_custom_call.1} parent=5 // pred_check_branch
        %140 = sbr.rel (%p138) target = $region16
      $region15: #{tpu_custom_call.1} parent=5 // pred_region
        // Predicated region
        $region17: #{tpu_custom_call.1} parent=15 // pred_check
          %p141 = pneg %p38
        $region18: #{tpu_custom_call.1} parent=15 // pred_check_branch
          %143 = sbr.rel (%p141) target = $region20
        $region19: #{tpu_custom_call.1} parent=15 // pred_region
          %s144 = sand.u32 %s28, 1
          %s145 = scalar_lea.sflag [#allocation3], %s144
          %s146 = sand.u32 %s28, 1
          %s147 = smul.addr %s146, 8
          %s148 = scalar_lea.vmem [#allocation2], %s147
          %s150 = ssub.s32 128, 128
          %151 = vsyncadd %s145, %s150
          %s152 = smul.addr %s18, 128
          %s153 = scalar_lea.hbm %s0, %s152
          %s155 = sshll.u32 %s148, 4
          %s156 = int_to_ptr.vmem [resolvable:$true] %s155
          %158 = dma.hbm_to_vmem [thread:$0]  %s153, 128, %s156, %s145
        $region20: #{tpu_custom_call.1} parent=15 // pred_fallthru
          _
        // Predicated region
        $region21: #{tpu_custom_call.1} parent=15 // pred_check
          %p159 = pneg %p64
        $region22: #{tpu_custom_call.1} parent=15 // pred_check_branch
          %161 = sbr.rel (%p159) target = $region24
        $region23: #{tpu_custom_call.1} parent=15 // pred_region
          %s162 = sand.u32 %s18, 1
          %s163 = scalar_lea.sflag [#allocation6], %s162
          %s164 = sand.u32 %s54, 1
          %s165 = smul.addr %s164, 8
          %s166 = scalar_lea.vmem [#allocation5], %s165
          %s168 = ssub.s32 128, 128
          %169 = vsyncadd %s163, %s168
          %s170 = smul.addr %s18, 128
          %s171 = scalar_lea.hbm %s1, %s170
          %s173 = sshll.u32 %s166, 4
          %s174 = int_to_ptr.vmem [resolvable:$true] %s173
          %176 = dma.hbm_to_vmem [thread:$0]  %s171, 128, %s174, %s163
        $region24: #{tpu_custom_call.1} parent=15 // pred_fallthru
          _
        // Predicated region
        $region25: #{tpu_custom_call.1} parent=15 // pred_check
          %p177 = pneg %p90
        $region26: #{tpu_custom_call.1} parent=15 // pred_check_branch
          %179 = sbr.rel (%p177) target = $region28
        $region27: #{tpu_custom_call.1} parent=15 // pred_region
          %s180 = sand.u32 %s18, 1
          %s181 = scalar_lea.sflag [#allocation6], %s180
          %s182 = sand.u32 %s80, 1
          %s183 = smul.addr %s182, 8
          %s184 = scalar_lea.vmem [#allocation7], %s183
          %s186 = ssub.s32 128, 128
          %187 = vsyncadd %s181, %s186
          %s188 = smul.addr %s18, 128
          %s189 = scalar_lea.hbm %s2, %s188
          %s191 = sshll.u32 %s184, 4
          %s192 = int_to_ptr.vmem [resolvable:$true] %s191
          %194 = dma.hbm_to_vmem [thread:$0]  %s189, 128, %s192, %s181
        $region28: #{tpu_custom_call.1} parent=15 // pred_fallthru
          _
      $region16: #{tpu_custom_call.1} parent=5 // pred_fallthru
        _
      %p195 = scmp.le.s32.totalorder 1, %s18
      %p196 = scmp.lt.s32.totalorder %s18, 3
      %p197 = pnand %p195, %p196
      %p198 = pneg %p197
      // Predicated region
      $region29: #{tpu_custom_call.1} parent=5 // pred_check
        _
      $region30: #{tpu_custom_call.1} parent=5 // pred_check_branch
        %200 = sbr.rel (%p197) target = $region32
      $region31: #{tpu_custom_call.1} parent=5 // pred_region
        %s201 = ssub.s32 %s18, 1
        %s202 = sand.u32 %s31, 1
        %s203 = scalar_lea.sflag [#allocation3], %s202
        %s204 = sand.u32 %s31, 1
        %s205 = smul.addr %s204, 8
        %s206 = scalar_lea.vmem [#allocation2], %s205
        // Predicated region
        $region33: #{tpu_custom_call.1} parent=31 // pred_check
          %p207 = pneg %p44
        $region34: #{tpu_custom_call.1} parent=31 // pred_check_branch
          %209 = sbr.rel (%p207) target = $region36
        $region35: #{tpu_custom_call.1} parent=31 // pred_region
          %210 = dma.done %s203, 128
        $region36: #{tpu_custom_call.1} parent=31 // pred_fallthru
          _
        %s211 = sand.u32 %s23, 1
        %s212 = scalar_lea.sflag [#allocation6], %s211
        %s213 = sand.u32 %s57, 1
        %s214 = smul.addr %s213, 8
        %s215 = scalar_lea.vmem [#allocation5], %s214
        // Predicated region
        $region37: #{tpu_custom_call.1} parent=31 // pred_check
          %p216 = pneg %p70
        $region38: #{tpu_custom_call.1} parent=31 // pred_check_branch
          %218 = sbr.rel (%p216) target = $region40
        $region39: #{tpu_custom_call.1} parent=31 // pred_region
          %219 = dma.done %s212, 128
        $region40: #{tpu_custom_call.1} parent=31 // pred_fallthru
          _
        %s220 = sand.u32 %s23, 1
        %s221 = scalar_lea.sflag [#allocation6], %s220
        %s222 = sand.u32 %s83, 1
        %s223 = smul.addr %s222, 8
        %s224 = scalar_lea.vmem [#allocation7], %s223
        // Predicated region
        $region41: #{tpu_custom_call.1} parent=31 // pred_check
          %p225 = pneg %p96
        $region42: #{tpu_custom_call.1} parent=31 // pred_check_branch
          %227 = sbr.rel (%p225) target = $region44
        $region43: #{tpu_custom_call.1} parent=31 // pred_region
          %228 = dma.done %s221, 128
        $region44: #{tpu_custom_call.1} parent=31 // pred_fallthru
          _
        %s229 = sand.u32 %s31, 1
        %s230 = scalar_lea.sflag [#allocation3], %s229
        %s231 = sand.u32 %s31, 1
        %s232 = smul.addr %s231, 8
        %s233 = scalar_lea.vmem [#allocation2], %s232
        %p234 = pneg %p44
        %p235 = pneg %p41
        %s236 = sand.u32 %s23, 1
        %s237 = scalar_lea.sflag [#allocation6], %s236
        %s238 = sand.u32 %s57, 1
        %s239 = smul.addr %s238, 8
        %s240 = scalar_lea.vmem [#allocation5], %s239
        %p241 = pneg %p70
        %p242 = pneg %p67
        %s243 = sand.u32 %s23, 1
        %s244 = scalar_lea.sflag [#allocation6], %s243
        %s245 = sand.u32 %s83, 1
        %s246 = smul.addr %s245, 8
        %s247 = scalar_lea.vmem [#allocation7], %s246
        %p248 = pneg %p96
        %p249 = pneg %p93
        %p250 = pneg %p122
        %p251 = pneg %p119
        %s252 = sand.u32 %s109, 1
        %s253 = scalar_lea.sflag [#allocation4], %s252
        %s254 = sand.u32 %s109, 1
        %s255 = smul.addr %s254, 8
        %s256 = scalar_lea.vmem [#allocation8], %s255
        %v257 = vld [vmem:[%s206] sm:$0xff]
        %v258 = vld [vmem:[%s215] sm:$0xff]
        %v259 = vmax.f32 %v258, 1e-05
        %v260 = vld [vmem:[%s224] sm:$0xff]
        %v261 = vsub.f32 %v257, %v260
        %v262 = vrcp.pop %v259
        %v263 = vmul.f32 %v262, 0.70710677
        %v264 = vsub.f32 0.5, %v261
        %v265 = vmul.f32 %v264, %v263
        %v266 = vand.u32 2147483647, %v265
        %v267 = vmin.f32 %v266, 4.0
        %v268 = vmul.f32 %v267, 0.3275911
        %v269 = vadd.f32 %v268, 1.0
        %v270 = vrcp.pop %v269
        %v271 = vmul.f32 %v270, 0.5307027
        %v272 = vadd.f32 %v271, -0.72657603
        %v273 = vmul.f32 %v270, %v272
        %v274 = vadd.f32 %v273, 0.7107069
        %v275 = vmul.f32 %v270, %v274
        %v276 = vadd.f32 %v275, -0.14224836
        %v277 = vmul.f32 %v270, %v276
        %v278 = vadd.f32 %v277, 0.1274148
        %v279 = vmul.f32 %v270, %v278
        %v280 = vmul.f32 %v267, %v267
        %v281 = vsub.f32 0.0, %v280
        %v282 = vmul.f32 %v281, 1.442695
        %v283 = vpow.pop %v282
        %v284 = vmul.f32 %v279, %v283
        %v285 = vsub.f32 0.5, %v284
        %vm286 = vcmp.lt.f32.partialorder %v265, 0.0
        %v287 = vsub.f32 0.0, %v285
        %v288 = vsel %vm286, %v287, %v285
        %v289 = vadd.f32 %v261, 0.5
        %v290 = vmul.f32 %v289, %v263
        %v291 = vand.u32 2147483647, %v290
        %v292 = vmin.f32 %v291, 4.0
        %v293 = vmul.f32 %v292, 0.3275911
        %v294 = vadd.f32 %v293, 1.0
        %v295 = vrcp.pop %v294
        %v296 = vmul.f32 %v295, 0.5307027
        %v297 = vadd.f32 %v296, -0.72657603
        %v298 = vmul.f32 %v295, %v297
        %v299 = vadd.f32 %v298, 0.7107069
        %v300 = vmul.f32 %v295, %v299
        %v301 = vadd.f32 %v300, -0.14224836
        %v302 = vmul.f32 %v295, %v301
        %v303 = vadd.f32 %v302, 0.1274148
        %v304 = vmul.f32 %v295, %v303
        %v305 = vmul.f32 %v292, %v292
        %v306 = vsub.f32 0.0, %v305
        %v307 = vmul.f32 %v306, 1.442695
        %v308 = vpow.pop %v307
        %v309 = vmul.f32 %v304, %v308
        %v310 = vsub.f32 0.5, %v309
        %vm311 = vcmp.lt.f32.partialorder %v290, 0.0
        %v312 = vsub.f32 0.0, %v310
        %v313 = vsel %vm311, %v312, %v310
        %v314 = vadd.f32 %v288, %v313
        %v315 = vadd.f32 %v288, 0.5
        %v316 = vadd.f32 %v313, 0.5
        %vm317 = vcmp.gt.f32.partialorder %v257, 254.999
        %v318 = vsel %vm317, %v316, %v314
        %vm319 = vcmp.lt.f32.partialorder %v257, -254.999
        %v320 = vsel %vm319, %v315, %v318
        %v321 = vmax.f32 %v320, 1e-06
        %322 = vst [vmem:[%s256] sm:$0xff] %v321
        %s323 = sand.u32 %s109, 1
        %s324 = scalar_lea.sflag [#allocation4], %s323
        %s325 = sand.u32 %s109, 1
        %s326 = smul.addr %s325, 8
        %s327 = scalar_lea.vmem [#allocation8], %s326
        // Predicated region
        $region45: #{tpu_custom_call.1} parent=31 // pred_check
          %p328 = pneg %p119
        $region46: #{tpu_custom_call.1} parent=31 // pred_check_branch
          %330 = sbr.rel (%p328) target = $region48
        $region47: #{tpu_custom_call.1} parent=31 // pred_region
          %s332 = ssub.s32 128, 128
          %333 = vsyncadd %s324, %s332
          %s334 = smul.addr %s23, 128
          %s335 = scalar_lea.hbm %s3, %s334
          %s337 = sshll.u32 %s327, 4
          %s338 = int_to_ptr.vmem [resolvable:$true] %s337
          %340 = dma.vmem_to_hbm [thread:$0]  %s338, 128, %s335, %s324
        $region48: #{tpu_custom_call.1} parent=31 // pred_fallthru
          _
      $region32: #{tpu_custom_call.1} parent=5 // pred_fallthru
        _
      %p341 = scmp.le.s32.totalorder 2, %s18
      // Predicated region
      $region49: #{tpu_custom_call.1} parent=5 // pred_check
        %p342 = pneg %p341
      $region50: #{tpu_custom_call.1} parent=5 // pred_check_branch
        %344 = sbr.rel (%p342) target = $region52
      $region51: #{tpu_custom_call.1} parent=5 // pred_region
        %s345 = ssub.s32 %s18, 2
        // Predicated region
        $region53: #{tpu_custom_call.1} parent=51 // pred_check
          %p346 = pneg %p125
        $region54: #{tpu_custom_call.1} parent=51 // pred_check_branch
          %348 = sbr.rel (%p346) target = $region56
        $region55: #{tpu_custom_call.1} parent=51 // pred_region
          %s349 = sand.u32 %s110, 1
          %s350 = scalar_lea.sflag [#allocation4], %s349
          %s351 = sand.u32 %s110, 1
          %s352 = smul.addr %s351, 8
          %s353 = scalar_lea.vmem [#allocation8], %s352
          %354 = dma.done %s350, 128
        $region56: #{tpu_custom_call.1} parent=51 // pred_fallthru
          _
      $region52: #{tpu_custom_call.1} parent=5 // pred_fallthru
        _
    $region6: #{tpu_custom_call.1} parent=1 // loop_footer
      %s22 = sadd.s32 1, %s18
    $region7: #{tpu_custom_call.1} parent=1 // loop_footer_branch
      %17 = sbr.rel target = $region3
    $region8: #{tpu_custom_call.1} parent=1 // loop_exit
      _
    %355 = vsyncpa [#allocation3], 1
    %s356 = scalar_lea.sflag [#allocation3], 1
    %357 = vsyncpa %s356, 1
    %358 = vsyncpa [#allocation6], 1
    %s359 = scalar_lea.sflag [#allocation6], 1
    %360 = vsyncpa %s359, 1
    %361 = vsyncpa [#allocation4], 1
    %s362 = scalar_lea.sflag [#allocation4], 1
    %363 = vsyncpa %s362, 1

</llo_original>
